<compile_context>
chip_gen: v7x
topology: tpu7x:2x2x1
jax: 0.10.0
libtpu: 0.0.40
codegen_flags: <defaults>
</compile_context>

<pallas_src>
import jax
import jax.numpy as jnp
from jax.experimental import pallas as pl
from jax.experimental.pallas import tpu as pltpu


def _mlp_kernel(x_ref, w1_ref, b1_ref, w2_ref, b2_ref, w3_ref, b3_ref, o_ref):
    # Row-major (TB, 16) tile straight from HBM; relayout to (16, TB) on the
    # XLU so the batch lives on the lane axis for all three matmuls.
    xt = jnp.transpose(x_ref[...])                                  # (16, TB)

    # Linear(16, 12) + ReLU   -> (12, TB)
    h1 = jnp.dot(w1_ref[...], xt, preferred_element_type=jnp.float32) + b1_ref[...]
    h1 = jnp.maximum(h1, 0.0)

    # Linear(12, 10) + ReLU   -> (10, TB)
    h2 = jnp.dot(w2_ref[...], h1, preferred_element_type=jnp.float32) + b2_ref[...]
    h2 = jnp.maximum(h2, 0.0)

    # Linear(10, 1)           -> (1, TB)
    h3 = jnp.dot(w3_ref[...], h2, preferred_element_type=jnp.float32) + b3_ref[...]

    # Sigmoid epilogue on the EUP; lane-dense (1, TB) store.
    o_ref[...] = jax.nn.sigmoid(h3)


def _round_up(n, m):
    return ((n + m - 1) // m) * m


def mynetwork2_forward(x, params, tb=32768):
    """x: (B, 16) float32 -> (B, 1) float32.

    params: (w1, b1, w2, b2, w3, b3) with PyTorch layout:
      w_i: (out_features, in_features), b_i: (out_features, 1).
    """
    w1, b1, w2, b2, w3, b3 = params
    B = x.shape[0]

    # Batch-lane tile selection.
    tb = max(128, (int(tb) // 128) * 128)
    if B <= 256:
        # Single block covering the whole array: block == full dims, so no
        # (8,128) / divisibility constraints and no padding of any kind.
        TB = B
    elif B <= 2 * tb:
        # Exactly two grid steps -> both v7x TensorCores get work.
        TB = _round_up((B + 1) // 2, 128)
    else:
        TB = tb
    grid = (pl.cdiv(B, TB),)

    # Advisory cost: bandwidth-dominated (reads x once, writes (1,B)).
    flops = 2 * (16 * 12 + 12 * 10 + 10 * 1) * B
    bytes_accessed = (B * 16 + B) * 4 + sum(int(p.size) for p in params) * 4
    cost = pl.CostEstimate(flops=flops, transcendentals=B,
                           bytes_accessed=bytes_accessed)

    out_t = pl.pallas_call(
        _mlp_kernel,
        out_shape=jax.ShapeDtypeStruct((1, B), jnp.float32),
        grid=grid,
        in_specs=[
            # Activations: row-contiguous (TB, 16) batch tile per grid step
            # (software-pipelined DMA, no host-side transpose/pad).
            pl.BlockSpec((TB, 16), lambda i: (i, 0)),
            # Weights / biases: constant index map => stay VMEM-resident.
            pl.BlockSpec(w1.shape, lambda i: (0, 0)),
            pl.BlockSpec(b1.shape, lambda i: (0, 0)),
            pl.BlockSpec(w2.shape, lambda i: (0, 0)),
            pl.BlockSpec(b2.shape, lambda i: (0, 0)),
            pl.BlockSpec(w3.shape, lambda i: (0, 0)),
            pl.BlockSpec(b3.shape, lambda i: (0, 0)),
        ],
        # Lane-dense (1, TB) output block.
        out_specs=pl.BlockSpec((1, TB), lambda i: (0, i)),
        compiler_params=pltpu.CompilerParams(
            dimension_semantics=("parallel",),
            vmem_limit_bytes=48 * 1024 * 1024),
        cost_estimate=cost,
    )(x, w1, b1, w2, b2, w3, b3)

    # (1, B) -> (B, 1): contiguous reshape, effectively free.
    return out_t.T


def init_params(key):
    """Deterministic init matching PyTorch Linear's U(-1/sqrt(fan_in), ...).

    Weights stored PyTorch-style (out, in); biases as (out, 1) columns.
    """
    dims = [(16, 12), (12, 10), (10, 1)]
    params = []
    for i, (fan_in, fan_out) in enumerate(dims):
        kw, kb, key = jax.random.split(jax.random.fold_in(key, i), 3)
        bound = 1.0 / (fan_in ** 0.5)
        w = jax.random.uniform(kw, (fan_out, fan_in), jnp.float32, -bound, bound)
        b = jax.random.uniform(kb, (fan_out, 1), jnp.float32, -bound, bound)
        params += [w, b]
    return tuple(params)


def _ref_forward(x, params):
    w1, b1, w2, b2, w3, b3 = params
    h = jnp.maximum(x @ w1.T + b1.T, 0.0)
    h = jnp.maximum(h @ w2.T + b2.T, 0.0)
    return jax.nn.sigmoid(h @ w3.T + b3.T)


if __name__ == "__main__":
    key = jax.random.PRNGKey(0)
    kx, kp, kx2, kx3 = jax.random.split(key, 4)
    params = init_params(kp)

    # Small batch as the module implies (Linear(16, ...)): single-block path.
    x = jax.random.normal(kx, (2, 16), jnp.float32)
    out = mynetwork2_forward(x, params)
    jax.block_until_ready(out)
    ref = _ref_forward(x, params)
    assert out.shape == (2, 1)
    assert jnp.allclose(out, ref, atol=3e-5, rtol=1e-5), "mismatch vs reference (B=2)"

    # Multi-step grid with a ragged final tile (B=260, TB=128 -> grid=(3,)).
    x2 = jax.random.normal(kx2, (260, 16), jnp.float32)
    out2 = mynetwork2_forward(x2, params, tb=128)
    jax.block_until_ready(out2)
    assert out2.shape == (260, 1)
    assert jnp.allclose(out2, _ref_forward(x2, params), atol=3e-5, rtol=1e-5), \
        "mismatch vs reference (B=260)"

    # Two-step parallel split path (B=400, tb=256 -> TB=256, grid=(2,)).
    x3 = jax.random.normal(kx3, (400, 16), jnp.float32)
    out3 = mynetwork2_forward(x3, params, tb=256)
    jax.block_until_ready(out3)
    assert out3.shape == (400, 1)
    assert jnp.allclose(out3, _ref_forward(x3, params), atol=3e-5, rtol=1e-5), \
        "mismatch vs reference (B=400)"

    print("KERNEL_OK")
</pallas_src>

<mosaic_0001>
module attributes {stable_mosaic.version = 11 : i64} {
  func.func @_mlp_kernel(%arg0: i32, %arg1: memref<2x16xf32, #tpu.memory_space<vmem>>, %arg2: memref<12x16xf32, #tpu.memory_space<vmem>>, %arg3: memref<12x1xf32, #tpu.memory_space<vmem>>, %arg4: memref<10x12xf32, #tpu.memory_space<vmem>>, %arg5: memref<10x1xf32, #tpu.memory_space<vmem>>, %arg6: memref<1x10xf32, #tpu.memory_space<vmem>>, %arg7: memref<1x1xf32, #tpu.memory_space<vmem>>, %arg8: memref<1x2xf32, #tpu.memory_space<vmem>>) attributes {dimension_semantics = [#tpu.dimension_semantics<parallel>], iteration_bounds = array<i64: 1>, scalar_prefetch = 0 : i64, scratch_operands = 0 : i64, tpu.core_type = #tpu.core_type<tc>, window_params = [{transform_indices = @transform_0, window_bounds = array<i64: 2, 16>}, {pipeline_mode = #tpu.pipeline_mode<synchronous>, transform_indices = @transform_1, window_bounds = array<i64: 12, 16>}, {pipeline_mode = #tpu.pipeline_mode<synchronous>, transform_indices = @transform_2, window_bounds = array<i64: 12, 1>}, {pipeline_mode = #tpu.pipeline_mode<synchronous>, transform_indices = @transform_3, window_bounds = array<i64: 10, 12>}, {pipeline_mode = #tpu.pipeline_mode<synchronous>, transform_indices = @transform_4, window_bounds = array<i64: 10, 1>}, {pipeline_mode = #tpu.pipeline_mode<synchronous>, transform_indices = @transform_5, window_bounds = array<i64: 1, 10>}, {pipeline_mode = #tpu.pipeline_mode<synchronous>, transform_indices = @transform_6, window_bounds = array<i64: 1, 1>}, {transform_indices = @transform_7, window_bounds = array<i64: 1, 2>}]} {
    %c0 = arith.constant 0 : index
    %c0_0 = arith.constant 0 : index
    %0 = vector.load %arg1[%c0, %c0_0] : memref<2x16xf32, #tpu.memory_space<vmem>>, vector<2x16xf32>
    %1 = tpu.transpose %0, [1, 0] : vector<2x16xf32> -> vector<16x2xf32>
    %c0_1 = arith.constant 0 : index
    %c0_2 = arith.constant 0 : index
    %2 = vector.load %arg2[%c0_1, %c0_2] : memref<12x16xf32, #tpu.memory_space<vmem>>, vector<12x16xf32>
    %cst = arith.constant dense<0.000000e+00> : vector<12x2xf32>
    %3 = tpu.matmul %2, %1, %cst {dimension_numbers = #tpu.dot_dimension_numbers<[1], [0], [0], [1], [0, 0, 1, 1], [], []>} : vector<12x16xf32>, vector<16x2xf32>, vector<12x2xf32> -> vector<12x2xf32>
    %c0_3 = arith.constant 0 : index
    %c0_4 = arith.constant 0 : index
    %4 = vector.load %arg3[%c0_3, %c0_4] : memref<12x1xf32, #tpu.memory_space<vmem>>, vector<12x1xf32>
    %5 = vector.broadcast %4 : vector<12x1xf32> to vector<12x2xf32>
    %6 = arith.addf %3, %5 : vector<12x2xf32>
    %cst_5 = arith.constant 0.000000e+00 : f32
    %7 = vector.broadcast %cst_5 : f32 to vector<12x2xf32>
    %8 = arith.maximumf %6, %7 : vector<12x2xf32>
    %c0_6 = arith.constant 0 : index
    %c0_7 = arith.constant 0 : index
    %9 = vector.load %arg4[%c0_6, %c0_7] : memref<10x12xf32, #tpu.memory_space<vmem>>, vector<10x12xf32>
    %cst_8 = arith.constant dense<0.000000e+00> : vector<10x2xf32>
    %10 = tpu.matmul %9, %8, %cst_8 {dimension_numbers = #tpu.dot_dimension_numbers<[1], [0], [0], [1], [0, 0, 1, 1], [], []>} : vector<10x12xf32>, vector<12x2xf32>, vector<10x2xf32> -> vector<10x2xf32>
    %c0_9 = arith.constant 0 : index
    %c0_10 = arith.constant 0 : index
    %11 = vector.load %arg5[%c0_9, %c0_10] : memref<10x1xf32, #tpu.memory_space<vmem>>, vector<10x1xf32>
    %12 = vector.broadcast %11 : vector<10x1xf32> to vector<10x2xf32>
    %13 = arith.addf %10, %12 : vector<10x2xf32>
    %cst_11 = arith.constant 0.000000e+00 : f32
    %14 = vector.broadcast %cst_11 : f32 to vector<10x2xf32>
    %15 = arith.maximumf %13, %14 : vector<10x2xf32>
    %c0_12 = arith.constant 0 : index
    %c0_13 = arith.constant 0 : index
    %16 = vector.load %arg6[%c0_12, %c0_13] : memref<1x10xf32, #tpu.memory_space<vmem>>, vector<1x10xf32>
    %cst_14 = arith.constant dense<0.000000e+00> : vector<1x2xf32>
    %17 = tpu.matmul %16, %15, %cst_14 {dimension_numbers = #tpu.dot_dimension_numbers<[1], [0], [0], [1], [0, 0, 1, 1], [], []>} : vector<1x10xf32>, vector<10x2xf32>, vector<1x2xf32> -> vector<1x2xf32>
    %c0_15 = arith.constant 0 : index
    %c0_16 = arith.constant 0 : index
    %18 = vector.load %arg7[%c0_15, %c0_16] : memref<1x1xf32, #tpu.memory_space<vmem>>, vector<1x1xf32>
    %19 = vector.broadcast %18 : vector<1x1xf32> to vector<1x2xf32>
    %20 = arith.addf %17, %19 : vector<1x2xf32>
    %21 = arith.negf %20 : vector<1x2xf32>
    %22 = math.exp %21 : vector<1x2xf32>
    %cst_17 = arith.constant 1.000000e+00 : f32
    %23 = vector.broadcast %cst_17 : f32 to vector<1x2xf32>
    %24 = arith.addf %23, %22 : vector<1x2xf32>
    %25 = arith.divf %23, %24 : vector<1x2xf32>
    %c0_18 = arith.constant 0 : index
    %c0_19 = arith.constant 0 : index
    %26 = vector.load %arg8[%c0_18, %c0_19] : memref<1x2xf32, #tpu.memory_space<vmem>>, vector<1x2xf32>
    tpu.vector_store %arg8[%c0_18, %c0_19], %25 {strides = array<i32>} : memref<1x2xf32, #tpu.memory_space<vmem>>, vector<1x2xf32>,
    return
  }
  func.func @transform_0(%arg0: i32) -> (i32, i32) {
    %c0_i32 = arith.constant 0 : i32
    %c0_i32_0 = arith.constant 0 : i32
    return %arg0, %c0_i32 : i32, i32
  }
  func.func @transform_1(%arg0: i32) -> (i32, i32) {
    %c0_i32 = arith.constant 0 : i32
    %c0_i32_0 = arith.constant 0 : i32
    %c0_i32_1 = arith.constant 0 : i32
    return %c0_i32, %c0_i32_0 : i32, i32
  }
  func.func @transform_2(%arg0: i32) -> (i32, i32) {
    %c0_i32 = arith.constant 0 : i32
    %c0_i32_0 = arith.constant 0 : i32
    %c0_i32_1 = arith.constant 0 : i32
    return %c0_i32, %c0_i32_0 : i32, i32
  }
  func.func @transform_3(%arg0: i32) -> (i32, i32) {
    %c0_i32 = arith.constant 0 : i32
    %c0_i32_0 = arith.constant 0 : i32
    %c0_i32_1 = arith.constant 0 : i32
    return %c0_i32, %c0_i32_0 : i32, i32
  }
  func.func @transform_4(%arg0: i32) -> (i32, i32) {
    %c0_i32 = arith.constant 0 : i32
    %c0_i32_0 = arith.constant 0 : i32
    %c0_i32_1 = arith.constant 0 : i32
    return %c0_i32, %c0_i32_0 : i32, i32
  }
  func.func @transform_5(%arg0: i32) -> (i32, i32) {
    %c0_i32 = arith.constant 0 : i32
    %c0_i32_0 = arith.constant 0 : i32
    %c0_i32_1 = arith.constant 0 : i32
    return %c0_i32, %c0_i32_0 : i32, i32
  }
  func.func @transform_6(%arg0: i32) -> (i32, i32) {
    %c0_i32 = arith.constant 0 : i32
    %c0_i32_0 = arith.constant 0 : i32
    %c0_i32_1 = arith.constant 0 : i32
    return %c0_i32, %c0_i32_0 : i32, i32
  }
  func.func @transform_7(%arg0: i32) -> (i32, i32) {
    %c0_i32 = arith.constant 0 : i32
    %c0_i32_0 = arith.constant 0 : i32
    return %c0_i32, %arg0 : i32, i32
  }
}

</mosaic_0001>

<llo_original>
// kernel: tpu_custom_call.1
$region0: #{tpu_custom_call.1}
  #allocation0 [shape = 'u32[]', space=smem, size = 0x4, offset = 0x4, fixed_abs, tag = 'smem constant byte address 0x4 - core index']
  #allocation1 [shape = 'u32[144,128]{1,0:T(1,128)}', space=vmem, size = 0x12000, scoped, tag = 'internal scratch']
  #allocation2 [shape = 'f32[1,1]{1,0:T(1,128)S(1)}', space=vmem, size = 0x200, scoped, tag = 'scoped memory for tpu_custom_call.1']
  %s0 = inlined_call_operand.vmem [shape: f32[2,16], index: 0, kind: input, shape index: {}]
  %s1 = inlined_call_operand.vmem [shape: f32[12,16], index: 1, kind: input, shape index: {}]
  %s2 = inlined_call_operand.vmem [shape: f32[12,1], index: 2, kind: input, shape index: {}]
  %s3 = inlined_call_operand.vmem [shape: f32[10,12], index: 3, kind: input, shape index: {}]
  %s4 = inlined_call_operand.vmem [shape: f32[10,1], index: 4, kind: input, shape index: {}]
  %s5 = inlined_call_operand.vmem [shape: f32[1,10], index: 5, kind: input, shape index: {}]
  %s6 = inlined_call_operand.<no memory space> [shape: f32[1,1], index: 6, kind: input, shape index: {}]
  %s7 = inlined_call_operand.hbm [shape: f32[1,2], index: 7, kind: output, shape index: {}]
  %s8 = sld [smem:[#allocation0]]
  $region38: #{tpu_custom_call.1} parent=0
    _
  %s10 = ssub.s32 1, %s8
  %s11 = scalar_select 0, %s10, %s8
  %v12 = vstv %s6
  %13 = vst [vmem:[#allocation2] sm:$0x1] %v12
  $region1: #{tpu_custom_call.1} parent=0
    #allocation3 [shape = 'u8[512]{0}', space=vmem, size = 0x400, scoped, tag = 'output window, operand 0, single buffered']
    #allocation4 [shape = 's32[1]{0}', space=sflag, size = 0x4, scoped, tag = 'scoped memory for tpu_custom_call.1']
    %14 = vsyncpa [#allocation4], 0
    // Predicated region
    $region2: #{tpu_custom_call.1} parent=1 // pred_check
      _
    $region3: #{tpu_custom_call.1} parent=1 // pred_check_branch
      %16 = sbr.rel (0) target = $region5
    $region4: #{tpu_custom_call.1} parent=1 // pred_region
      _
    $region5: #{tpu_custom_call.1} parent=1 // pred_fallthru
      _
    // Predicated region
    $region6: #{tpu_custom_call.1} parent=1 // pred_check
      _
    $region7: #{tpu_custom_call.1} parent=1 // pred_check_branch
      %18 = sbr.rel (0) target = $region9
    $region8: #{tpu_custom_call.1} parent=1 // pred_region
      _
    $region9: #{tpu_custom_call.1} parent=1 // pred_fallthru
      _
    // Predicated region
    $region10: #{tpu_custom_call.1} parent=1 // pred_check
      _
    $region11: #{tpu_custom_call.1} parent=1 // pred_check_branch
      %20 = sbr.rel (0) target = $region13
    $region12: #{tpu_custom_call.1} parent=1 // pred_region
      _
    $region13: #{tpu_custom_call.1} parent=1 // pred_fallthru
      _
    // Predicated region
    $region14: #{tpu_custom_call.1} parent=1 // pred_check
      _
    $region15: #{tpu_custom_call.1} parent=1 // pred_check_branch
      %22 = sbr.rel (0) target = $region17
    $region16: #{tpu_custom_call.1} parent=1 // pred_region
      _
    $region17: #{tpu_custom_call.1} parent=1 // pred_fallthru
      _
    // Predicated region
    $region18: #{tpu_custom_call.1} parent=1 // pred_check
      _
    $region19: #{tpu_custom_call.1} parent=1 // pred_check_branch
      %24 = sbr.rel (0) target = $region21
    $region20: #{tpu_custom_call.1} parent=1 // pred_region
      _
    $region21: #{tpu_custom_call.1} parent=1 // pred_fallthru
      _
    // Predicated region
    $region22: #{tpu_custom_call.1} parent=1 // pred_check
      _
    $region23: #{tpu_custom_call.1} parent=1 // pred_check_branch
      %26 = sbr.rel (0) target = $region25
    $region24: #{tpu_custom_call.1} parent=1 // pred_region
      _
    $region25: #{tpu_custom_call.1} parent=1 // pred_fallthru
      _
    // Predicated region
    $region26: #{tpu_custom_call.1} parent=1 // pred_check
      _
    $region27: #{tpu_custom_call.1} parent=1 // pred_check_branch
      %28 = sbr.rel (0) target = $region29
    $region28: #{tpu_custom_call.1} parent=1 // pred_region
      _
    $region29: #{tpu_custom_call.1} parent=1 // pred_fallthru
      _
    %v29 = vld [vmem:[%s0] sm:$0x3]
    %v30 = vld [vmem:[%s1] sm:$0xff]
    %v31 = vld [vmem:[%s1 + $0x8] sm:$0xf]
    %v32 = vld [vmem:[%s2] sm:$0xff]
    %v33 = vld [vmem:[%s2 + $0x8] sm:$0xf]
    %35 = vset.pattern.permute.xlu0 0
    %36 = vperm.xlu0 %35, %v32
    %v37 = vpop.permute.xlu0 %36
    %40 = vset.pattern.permute.xlu0 0
    %41 = vperm.xlu0 %40, %v33
    %v42 = vpop.permute.xlu0 %41
    %vm44 = vcmask 130048
    %v46 = vsel %vm44, %v30, 0
    %v49 = vsel %vm44, %v31, 0
    %v52 = vsel %vm44, %v29, 0
    %54 = vmatprep.subr.mxu0 0.0
    %55 = vmatpush1.xpose.msra.mxu0 %v52
    %56 = vmatprep.subr.mxu0 0.0
    %57 = vmatpush1.xpose.msra.mxu0 0.0
    %58 = vmatprep.subr.mxu0 0.0
    %59 = vmatpush1.xpose.msra.mxu0 0.0
    %60 = vmatprep.subr.mxu0 0.0
    %61 = vmatpush1.xpose.msra.mxu0 0.0
    %62 = vmatprep.subr.mxu0 0.0
    %63 = vmatpush1.xpose.msra.mxu0 0.0
    %64 = vmatprep.subr.mxu0 0.0
    %65 = vmatpush1.xpose.msra.mxu0 0.0
    %66 = vmatprep.subr.mxu0 0.0
    %67 = vmatpush1.xpose.msra.mxu0 0.0
    %68 = vmatprep.subr.mxu0 0.0
    %69 = vmatpush1.xpose.msra.mxu0 0.0
    %70 = vmatprep.subr.mxu0 0.0
    %71 = vmatpush1.xpose.msra.mxu0 0.0
    %72 = vmatprep.subr.mxu0 0.0
    %73 = vmatpush1.xpose.msra.mxu0 0.0
    %74 = vmatprep.subr.mxu0 0.0
    %75 = vmatpush1.xpose.msra.mxu0 0.0
    %76 = vmatprep.subr.mxu0 0.0
    %77 = vmatpush1.xpose.msra.mxu0 0.0
    %78 = vmatprep.subr.mxu0 0.0
    %79 = vmatpush1.xpose.msra.mxu0 0.0
    %80 = vmatprep.subr.mxu0 0.0
    %81 = vmatpush1.xpose.msra.mxu0 0.0
    %82 = vmatprep.subr.mxu0 0.0
    %83 = vmatpush1.xpose.msra.mxu0 0.0
    %84 = vmatprep.subr.mxu0 0.0
    %85 = vmatpush1.xpose.msra.mxu0 0.0
    %86 = vmatprep.subr.mxu0 0.0
    %87 = vmatpush1.xpose.msra.mxu0 0.0
    %88 = vmatprep.subr.mxu0 0.0
    %89 = vmatpush1.xpose.msra.mxu0 0.0
    %90 = vmatprep.subr.mxu0 0.0
    %91 = vmatpush1.xpose.msra.mxu0 0.0
    %92 = vmatprep.subr.mxu0 0.0
    %93 = vmatpush1.xpose.msra.mxu0 0.0
    %94 = vmatprep.subr.mxu0 0.0
    %95 = vmatpush1.xpose.msra.mxu0 0.0
    %96 = vmatprep.subr.mxu0 0.0
    %97 = vmatpush1.xpose.msra.mxu0 0.0
    %98 = vmatprep.subr.mxu0 0.0
    %99 = vmatpush1.xpose.msra.mxu0 0.0
    %100 = vmatprep.subr.mxu0 0.0
    %101 = vmatpush1.xpose.msra.mxu0 0.0
    %102 = vmatprep.subr.mxu0 0.0
    %103 = vmatpush1.xpose.msra.mxu0 0.0
    %104 = vmatprep.subr.mxu0 0.0
    %105 = vmatpush1.xpose.msra.mxu0 0.0
    %106 = vmatprep.subr.mxu0 0.0
    %107 = vmatpush1.xpose.msra.mxu0 0.0
    %108 = vmatprep.subr.mxu0 0.0
    %109 = vmatpush1.xpose.msra.mxu0 0.0
    %110 = vmatprep.subr.mxu0 0.0
    %111 = vmatpush1.xpose.msra.mxu0 0.0
    %112 = vmatprep.subr.mxu0 0.0
    %113 = vmatpush1.xpose.msra.mxu0 0.0
    %114 = vmatprep.subr.mxu0 0.0
    %115 = vmatpush1.xpose.msra.mxu0 0.0
    %116 = vmatprep.subr.mxu0 0.0
    %117 = vmatpush1.xpose.msra.mxu0 0.0
    %118 = vmatprep.mubr.f32.mxu0 0.0
    %119 = vmatmul.mubr.f32.gmra.mrb[0].mxu0 %v46
    %v120 = vpop.f32.mrb[0].mxu0
    %v121 = vadd.f32 %v37, %v120
    %v122 = vpop.f32.mrb[0].mxu0
    %123 = vmatprep.mubr.f32.mxu0 0.0
    %124 = vmatmul.mubr.f32.gmra.mrb[0].mxu0 %v49
    %v125 = vpop.f32.mrb[0].mxu0
    %v126 = vadd.f32 %v42, %v125
    %v127 = vpop.f32.mrb[0].mxu0
    %128 = vdwg.mxu0
    %v129 = vmax.f32 %v121, 0.0
    %v130 = vmax.f32 %v126, 0.0
    %v131 = vld [vmem:[%s3] sm:$0xff]
    %v132 = vld [vmem:[%s3 + $0x8] sm:$0x3]
    %v133 = vld [vmem:[%s4] sm:$0xff]
    %v134 = vld [vmem:[%s4 + $0x8] sm:$0x3]
    %136 = vset.pattern.permute.xlu0 0
    %137 = vperm.xlu0 %136, %v133
    %v138 = vpop.permute.xlu0 %137
    %141 = vset.pattern.permute.xlu0 0
    %142 = vperm.xlu0 %141, %v134
    %v143 = vpop.permute.xlu0 %142
    %vm145 = vcmask 97280
    %v147 = vsel %vm145, %v131, 0
    %v150 = vsel %vm145, %v132, 0
    %vm152 = vcmask 1043456
    %v154 = vsel %vm152, %v130, 0
    %156 = vmatprep.subr.mxu0 0.0
    %157 = vmatpush1.msra.mxu0 %v129
    %158 = vmatprep.subr.mxu0 0.0
    %159 = vmatpush1.msra.mxu0 %v154
    %160 = vmatprep.subr.mxu0 0.0
    %161 = vmatpush1.msra.mxu0 0.0
    %162 = vmatprep.subr.mxu0 0.0
    %163 = vmatpush1.msra.mxu0 0.0
    %164 = vmatprep.subr.mxu0 0.0
    %165 = vmatpush1.msra.mxu0 0.0
    %166 = vmatprep.subr.mxu0 0.0
    %167 = vmatpush1.msra.mxu0 0.0
    %168 = vmatprep.subr.mxu0 0.0
    %169 = vmatpush1.msra.mxu0 0.0
    %170 = vmatprep.subr.mxu0 0.0
    %171 = vmatpush1.msra.mxu0 0.0
    %172 = vmatprep.subr.mxu0 0.0
    %173 = vmatpush1.msra.mxu0 0.0
    %174 = vmatprep.subr.mxu0 0.0
    %175 = vmatpush1.msra.mxu0 0.0
    %176 = vmatprep.subr.mxu0 0.0
    %177 = vmatpush1.msra.mxu0 0.0
    %178 = vmatprep.subr.mxu0 0.0
    %179 = vmatpush1.msra.mxu0 0.0
    %180 = vmatprep.subr.mxu0 0.0
    %181 = vmatpush1.msra.mxu0 0.0
    %182 = vmatprep.subr.mxu0 0.0
    %183 = vmatpush1.msra.mxu0 0.0
    %184 = vmatprep.subr.mxu0 0.0
    %185 = vmatpush1.msra.mxu0 0.0
    %186 = vmatprep.subr.mxu0 0.0
    %187 = vmatpush1.msra.mxu0 0.0
    %188 = vmatprep.subr.mxu0 0.0
    %189 = vmatpush1.msra.mxu0 0.0
    %190 = vmatprep.subr.mxu0 0.0
    %191 = vmatpush1.msra.mxu0 0.0
    %192 = vmatprep.subr.mxu0 0.0
    %193 = vmatpush1.msra.mxu0 0.0
    %194 = vmatprep.subr.mxu0 0.0
    %195 = vmatpush1.msra.mxu0 0.0
    %196 = vmatprep.subr.mxu0 0.0
    %197 = vmatpush1.msra.mxu0 0.0
    %198 = vmatprep.subr.mxu0 0.0
    %199 = vmatpush1.msra.mxu0 0.0
    %200 = vmatprep.subr.mxu0 0.0
    %201 = vmatpush1.msra.mxu0 0.0
    %202 = vmatprep.subr.mxu0 0.0
    %203 = vmatpush1.msra.mxu0 0.0
    %204 = vmatprep.subr.mxu0 0.0
    %205 = vmatpush1.msra.mxu0 0.0
    %206 = vmatprep.subr.mxu0 0.0
    %207 = vmatpush1.msra.mxu0 0.0
    %208 = vmatprep.subr.mxu0 0.0
    %209 = vmatpush1.msra.mxu0 0.0
    %210 = vmatprep.subr.mxu0 0.0
    %211 = vmatpush1.msra.mxu0 0.0
    %212 = vmatprep.subr.mxu0 0.0
    %213 = vmatpush1.msra.mxu0 0.0
    %214 = vmatprep.subr.mxu0 0.0
    %215 = vmatpush1.msra.mxu0 0.0
    %216 = vmatprep.subr.mxu0 0.0
    %217 = vmatpush1.msra.mxu0 0.0
    %218 = vmatprep.subr.mxu0 0.0
    %219 = vmatpush1.msra.mxu0 0.0
    %220 = vmatprep.mubr.f32.mxu0 0.0
    %221 = vmatmul.mubr.f32.gmra.mrb[0].mxu0 %v147
    %v222 = vpop.f32.mrb[0].mxu0
    %v223 = vadd.f32 %v138, %v222
    %v224 = vpop.f32.mrb[0].mxu0
    %225 = vmatprep.mubr.f32.mxu0 0.0
    %226 = vmatmul.mubr.f32.gmra.mrb[0].mxu0 %v150
    %v227 = vpop.f32.mrb[0].mxu0
    %v228 = vadd.f32 %v143, %v227
    %v229 = vpop.f32.mrb[0].mxu0
    %230 = vdwg.mxu0
    %v231 = vmax.f32 %v223, 0.0
    %v232 = vmax.f32 %v228, 0.0
    %v233 = vld [vmem:[%s5] sm:$0x1]
    %v234 = vld [vmem:[#allocation2] sm:$0x1]
    %236 = vset.pattern.permute.xlu0 0
    %237 = vperm.xlu0 %236, %v234
    %v238 = vpop.permute.xlu0 %237
    %v240 = vlaneseq
    %v241 = vshrl.u32 %v240, 7
    %v242 = vsub.s32 0, %v241
    %v243 = vrot.slane %v238, %v242
    %vm244 = vcmask 80896
    %v246 = vsel %vm244, %v233, 0
    %vm248 = vcmask 1041408
    %v250 = vsel %vm248, %v232, 0
    %252 = vmatprep.subr.mxu0 0.0
    %253 = vmatpush1.msra.mxu0 %v231
    %254 = vmatprep.subr.mxu0 0.0
    %255 = vmatpush1.msra.mxu0 %v250
    %256 = vmatprep.subr.mxu0 0.0
    %257 = vmatpush1.msra.mxu0 0.0
    %258 = vmatprep.subr.mxu0 0.0
    %259 = vmatpush1.msra.mxu0 0.0
    %260 = vmatprep.subr.mxu0 0.0
    %261 = vmatpush1.msra.mxu0 0.0
    %262 = vmatprep.subr.mxu0 0.0
    %263 = vmatpush1.msra.mxu0 0.0
    %264 = vmatprep.subr.mxu0 0.0
    %265 = vmatpush1.msra.mxu0 0.0
    %266 = vmatprep.subr.mxu0 0.0
    %267 = vmatpush1.msra.mxu0 0.0
    %268 = vmatprep.subr.mxu0 0.0
    %269 = vmatpush1.msra.mxu0 0.0
    %270 = vmatprep.subr.mxu0 0.0
    %271 = vmatpush1.msra.mxu0 0.0
    %272 = vmatprep.subr.mxu0 0.0
    %273 = vmatpush1.msra.mxu0 0.0
    %274 = vmatprep.subr.mxu0 0.0
    %275 = vmatpush1.msra.mxu0 0.0
    %276 = vmatprep.subr.mxu0 0.0
    %277 = vmatpush1.msra.mxu0 0.0
    %278 = vmatprep.subr.mxu0 0.0
    %279 = vmatpush1.msra.mxu0 0.0
    %280 = vmatprep.subr.mxu0 0.0
    %281 = vmatpush1.msra.mxu0 0.0
    %282 = vmatprep.subr.mxu0 0.0
    %283 = vmatpush1.msra.mxu0 0.0
    %284 = vmatprep.subr.mxu0 0.0
    %285 = vmatpush1.msra.mxu0 0.0
    %286 = vmatprep.subr.mxu0 0.0
    %287 = vmatpush1.msra.mxu0 0.0
    %288 = vmatprep.subr.mxu0 0.0
    %289 = vmatpush1.msra.mxu0 0.0
    %290 = vmatprep.subr.mxu0 0.0
    %291 = vmatpush1.msra.mxu0 0.0
    %292 = vmatprep.subr.mxu0 0.0
    %293 = vmatpush1.msra.mxu0 0.0
    %294 = vmatprep.subr.mxu0 0.0
    %295 = vmatpush1.msra.mxu0 0.0
    %296 = vmatprep.subr.mxu0 0.0
    %297 = vmatpush1.msra.mxu0 0.0
    %298 = vmatprep.subr.mxu0 0.0
    %299 = vmatpush1.msra.mxu0 0.0
    %300 = vmatprep.subr.mxu0 0.0
    %301 = vmatpush1.msra.mxu0 0.0
    %302 = vmatprep.subr.mxu0 0.0
    %303 = vmatpush1.msra.mxu0 0.0
    %304 = vmatprep.subr.mxu0 0.0
    %305 = vmatpush1.msra.mxu0 0.0
    %306 = vmatprep.subr.mxu0 0.0
    %307 = vmatpush1.msra.mxu0 0.0
    %308 = vmatprep.subr.mxu0 0.0
    %309 = vmatpush1.msra.mxu0 0.0
    %310 = vmatprep.subr.mxu0 0.0
    %311 = vmatpush1.msra.mxu0 0.0
    %312 = vmatprep.subr.mxu0 0.0
    %313 = vmatpush1.msra.mxu0 0.0
    %314 = vmatprep.subr.mxu0 0.0
    %315 = vmatpush1.msra.mxu0 0.0
    %316 = vmatprep.mubr.f32.mxu0 0.0
    %317 = vmatmul.mubr.f32.gmra.mrb[0].mxu0 %v246
    %v318 = vpop.f32.mrb[0].mxu0
    %v319 = vadd.f32 %v243, %v318
    %v320 = vpop.f32.mrb[0].mxu0
    %321 = vdwg.mxu0
    %v322 = vxor.u32 %v319, 2147483648
    %v323 = vmul.f32 %v322, 1.442695
    %v324 = vpow.pop %v323
    %v325 = vadd.f32 %v324, 1.0
    %v326 = vrcp.pop %v325
    %v327 = vmul.f32 1.0, %v326
    %vm328 = vcmask 8192
    %329 = vst.msk [vmem:[#allocation3] sm:$0x1] %vm328, %v327
    // Predicated region
    $region30: #{tpu_custom_call.1} parent=1 // pred_check
      _
    $region31: #{tpu_custom_call.1} parent=1 // pred_check_branch
      %331 = sbr.rel (0) target = $region33
    $region32: #{tpu_custom_call.1} parent=1 // pred_region
      %s333 = ssub.s32 16, 16
      %334 = vsyncadd [#allocation4], %s333
      %s336 = sshll.u32 [#allocation3], 4
      %s337 = int_to_ptr.vmem [resolvable:$true] %s336
      %339 = dma.vmem_to_hbm [thread:$0]  %s337, 16, %s7, [#allocation4]
    $region33: #{tpu_custom_call.1} parent=1 // pred_fallthru
      _
    // Predicated region
    $region34: #{tpu_custom_call.1} parent=1 // pred_check
      _
    $region35: #{tpu_custom_call.1} parent=1 // pred_check_branch
      %341 = sbr.rel (0) target = $region37
    $region36: #{tpu_custom_call.1} parent=1 // pred_region
      %342 = dma.done [#allocation4], 16
    $region37: #{tpu_custom_call.1} parent=1 // pred_fallthru
      _
    %343 = vsyncpa [#allocation4], 1

</llo_original>
